<compile_context>
chip_gen: v7x
topology: tpu7x:2x2x1
jax: 0.10.0
libtpu: 0.0.40
codegen_flags: <defaults>
</compile_context>

<pallas_src>
import functools

import jax
import jax.numpy as jnp
import numpy as np
from jax import lax
from jax.experimental import pallas as pl
from jax.experimental.pallas import tpu as pltpu  # noqa: F401  (TPU backend)


# ---------------------------------------------------------------------------
# shared in-kernel helpers
# ---------------------------------------------------------------------------
def _masks(n):
    r = lax.broadcasted_iota(jnp.int32, (n, n), 0)
    c = lax.broadcasted_iota(jnp.int32, (n, n), 1)
    return r == c, r < c  # (eye, strict-upper)


def _sq_dists(a):
    """Pairwise squared distances of the rows of a (n, d) f32 tile.

    Gram via dot_general contracting the last dims (no `.T` materialized);
    squared norms taken from the Gram diagonal with an iota mask, so no
    transpose / relayout is needed anywhere.
    """
    n = a.shape[0]
    gram = lax.dot_general(a, a, (((1,), (1,)), ((), ())),
                           preferred_element_type=jnp.float32)     # a @ a.T
    eye, _ = _masks(n)
    diag = jnp.where(eye, gram, 0.0)
    sq_col = jnp.sum(diag, axis=1, keepdims=True)   # (n, 1)  ||a_i||^2
    sq_row = jnp.sum(diag, axis=0, keepdims=True)   # (1, n)  ||a_j||^2
    return sq_col + sq_row - 2.0 * gram


def _sum11(m):
    return jnp.sum(jnp.sum(m, axis=1, keepdims=True), axis=0, keepdims=True)


# ---------------------------------------------------------------------------
# Kernel 1: strict-upper-triangle pairwise squared distances for X and Y
# (feeds the data-dependent median -> kernel widths)
# ---------------------------------------------------------------------------
def _upper_dists_kernel(x_ref, y_ref, dx_ref, dy_ref):
    n = x_ref.shape[0]
    _, upper = _masks(n)
    dx_ref[...] = jnp.where(upper, _sq_dists(x_ref[...]), 0.0)
    dy_ref[...] = jnp.where(upper, _sq_dists(y_ref[...]), 0.0)


# ---------------------------------------------------------------------------
# Kernel 2: fused RBF kernels + double centering + HSIC scalar statistics
# ---------------------------------------------------------------------------
def _hsic_stats_kernel(x_ref, y_ref, cx_ref, cy_ref, ts_ref, var_ref, mh_ref):
    n = x_ref.shape[0]
    nf = float(n)
    eye, _ = _masks(n)

    # rbf_dot: K = exp(-dists / (2*width^2));  cx/cy hold 1/(2*width^2)
    K = jnp.exp(-_sq_dists(x_ref[...]) * cx_ref[...])    # (n, n)
    L = jnp.exp(-_sq_dists(y_ref[...]) * cy_ref[...])    # (n, n)

    # H K H == K - rowmean - colmean + grandmean  (double centering, VPU only)
    def center(M):
        row = jnp.sum(M, axis=1, keepdims=True) / nf     # (n, 1)
        col = jnp.sum(M, axis=0, keepdims=True) / nf     # (1, n)
        tot = jnp.sum(col, axis=1, keepdims=True) / nf   # (1, 1)
        return M - row - col + tot

    Kc = center(K)
    Lc = center(L)

    # Kc is symmetric (K, H symmetric) => sum(Kc.T * Lc) == sum(Kc * Lc);
    # avoids an in-kernel transpose.
    ts = _sum11(Kc * Lc) / nf

    vmat = (Kc * Lc / 6.0) ** 2
    v = (_sum11(vmat) - _sum11(jnp.where(eye, vmat, 0.0))) / nf / (nf - 1.0)
    v = v * 72.0 * (nf - 4.0) * (nf - 5.0) / nf / (nf - 1.0) / (nf - 2.0) / (nf - 3.0)

    mux = _sum11(jnp.where(eye, 0.0, K)) / nf / (nf - 1.0)
    muy = _sum11(jnp.where(eye, 0.0, L)) / nf / (nf - 1.0)
    mh = (1.0 + mux * muy - mux - muy) / nf

    ts_ref[...] = ts
    var_ref[...] = v
    mh_ref[...] = mh


# ---------------------------------------------------------------------------
# glue: median of positive entries, gamma.ppf via gammainc bisection
# ---------------------------------------------------------------------------
def _median_of_positive(flat):
    """np.median(flat[flat > 0]) with a data-dependent positive count."""
    pos = flat > 0.0
    m = jnp.sum(pos.astype(jnp.int32))
    s = jnp.sort(jnp.where(pos, flat, jnp.inf))
    lo = s[jnp.maximum((m - 1) // 2, 0)]
    hi = s[jnp.maximum(m // 2, 0)]
    return 0.5 * (lo + hi)


def _gamma_ppf(p, a, scale):
    """scipy.stats.gamma.ppf(p, a, scale=scale) via bisection on gammainc."""
    def cdf(x):
        return jax.scipy.special.gammainc(a, x)

    hi0 = a + 10.0 * jnp.sqrt(a) + 10.0
    hi = lax.while_loop(lambda h: cdf(h) < p, lambda h: h * 2.0, hi0)
    lo = jnp.zeros_like(hi)

    def body(_, lohi):
        lo, hi = lohi
        mid = 0.5 * (lo + hi)
        right = cdf(mid) < p
        return jnp.where(right, mid, lo), jnp.where(right, hi, mid)

    lo, hi = lax.fori_loop(0, 80, body, (lo, hi))
    return 0.5 * (lo + hi) * scale


# ---------------------------------------------------------------------------
# forward wrapper
# ---------------------------------------------------------------------------
def hsic_forward(X, Y, alph=0.8):
    n, dx = X.shape
    _, dy = Y.shape
    f32 = jnp.float32
    full = lambda shape: pl.BlockSpec(shape, lambda: (0,) * len(shape))

    # TODO(synk): for large n, tile the (n, n) work over a grid with
    # (8,128)-aligned blocks + "parallel" dimension_semantics; at n=8 every
    # operand fits in a single VMEM block, so the gridless form is fastest.
    ux, uy = pl.pallas_call(
        _upper_dists_kernel,
        out_shape=(jax.ShapeDtypeStruct((n, n), f32),
                   jax.ShapeDtypeStruct((n, n), f32)),
        in_specs=[full((n, dx)), full((n, dy))],
        out_specs=(full((n, n)), full((n, n))),
    )(X, Y)

    width_x = jnp.sqrt(0.5 * _median_of_positive(ux.reshape(-1)))
    width_y = jnp.sqrt(0.5 * _median_of_positive(uy.reshape(-1)))
    cx = (1.0 / (2.0 * width_x * width_x)).astype(f32).reshape(1, 1)
    cy = (1.0 / (2.0 * width_y * width_y)).astype(f32).reshape(1, 1)

    ts, var, mh = pl.pallas_call(
        _hsic_stats_kernel,
        out_shape=tuple(jax.ShapeDtypeStruct((1, 1), f32) for _ in range(3)),
        in_specs=[full((n, dx)), full((n, dy)), full((1, 1)), full((1, 1))],
        out_specs=tuple(full((1, 1)) for _ in range(3)),
    )(X, Y, cx, cy)

    ts = ts[0, 0]
    var = var[0, 0]
    mh = mh[0, 0]
    al = mh * mh / var
    bet = var * n / mh
    thresh = _gamma_ppf(jnp.float32(1.0 - alph), al, bet)
    return ts, thresh, (var, mh, al, bet)


# ---------------------------------------------------------------------------
# numpy (float64) reference mirroring the PyTorch module (no scipy needed for
# testStat / varHSIC / mHSIC; thresh is checked via a gammainc round trip)
# ---------------------------------------------------------------------------
def _hsic_stats_reference_np(X, Y):
    X = np.asarray(X, np.float64)
    Y = np.asarray(Y, np.float64)
    n = X.shape[0]

    def width(M):
        G = np.sum(M * M, 1).reshape(n, 1)
        Q = np.tile(G, (1, n))
        R = np.tile(G.T, (n, 1))
        dists = Q + R - 2 * np.dot(M, M.T)
        dists = dists - np.tril(dists)
        dists = dists.reshape(n ** 2, 1)
        return np.sqrt(0.5 * np.median(dists[dists > 0]))

    def rbf(p1, p2, deg):
        G = np.sum(p1 * p1, 1).reshape(p1.shape[0], 1)
        Hh = np.sum(p2 * p2, 1).reshape(p2.shape[0], 1)
        Q = np.tile(G, (1, p2.shape[0]))
        R = np.tile(Hh.T, (p1.shape[0], 1))
        H2 = Q + R - 2 * np.dot(p1, p2.T)
        return np.exp(-H2 / 2 / deg ** 2)

    wx = width(X)
    wy = width(Y)
    bone = np.ones((n, 1))
    H = np.identity(n) - np.ones((n, n)) / n
    K = rbf(X, X, wx)
    L = rbf(Y, Y, wy)
    Kc = H @ K @ H
    Lc = H @ L @ H
    testStat = np.sum(Kc.T * Lc) / n
    varHSIC = (Kc * Lc / 6) ** 2
    varHSIC = (np.sum(varHSIC) - np.trace(varHSIC)) / n / (n - 1)
    varHSIC = varHSIC * 72 * (n - 4) * (n - 5) / n / (n - 1) / (n - 2) / (n - 3)
    K0 = K - np.diag(np.diag(K))
    L0 = L - np.diag(np.diag(L))
    muX = (bone.T @ K0 @ bone).item() / n / (n - 1)
    muY = (bone.T @ L0 @ bone).item() / n / (n - 1)
    mHSIC = (1 + muX * muY - muX - muY) / n
    return float(testStat), float(varHSIC), float(mHSIC)


if __name__ == "__main__":
    n, dx, dy = 8, 32, 16
    key = jax.random.PRNGKey(0)
    kx, kn = jax.random.split(key)
    X = jax.random.normal(kx, (n, dx), dtype=jnp.float32)
    noise = jax.random.normal(kn, (n, dy), dtype=jnp.float32)
    # partially dependent Y -> well-conditioned (non-cancelling) test statistic
    Y = (0.5 * X[:, :dy] + 0.25 * noise).astype(jnp.float32)

    fwd = jax.jit(functools.partial(hsic_forward, alph=0.8))
    testStat, thresh, (var, mh, al, bet) = fwd(X, Y)
    testStat, thresh, var, mh, al, bet = jax.block_until_ready(
        (testStat, thresh, var, mh, al, bet))

    ts_ref, var_ref, mh_ref = _hsic_stats_reference_np(X, Y)
    np.testing.assert_allclose(float(testStat), ts_ref, rtol=5e-3, atol=1e-6)
    np.testing.assert_allclose(float(var), var_ref, rtol=5e-3, atol=1e-10)
    np.testing.assert_allclose(float(mh), mh_ref, rtol=5e-3, atol=1e-7)

    # thresh validation: gamma.cdf(thresh, al, scale=bet) must equal 1 - alph.
    q = float(jax.scipy.special.gammainc(al, thresh / bet))
    assert abs(q - 0.2) < 1e-3, f"gamma ppf round-trip failed: q={q}"

    print("KERNEL_OK")
</pallas_src>

<mosaic_0001>
module attributes {stable_mosaic.version = 11 : i64} {
  func.func @_upper_dists_kernel(%arg0: memref<8x32xf32, #tpu.memory_space<vmem>>, %arg1: memref<8x16xf32, #tpu.memory_space<vmem>>, %arg2: memref<8x8xf32, #tpu.memory_space<vmem>>, %arg3: memref<8x8xf32, #tpu.memory_space<vmem>>) attributes {dimension_semantics = [], scalar_prefetch = 0 : i64, scratch_operands = 0 : i64, tpu.core_type = #tpu.core_type<tc>} {
    %0 = tpu.iota {dimensions = array<i32: 0>} : vector<8x8xi32>
    %1 = tpu.iota {dimensions = array<i32: 1>} : vector<8x8xi32>
    %2 = arith.cmpi slt, %0, %1 : vector<8x8xi32>
    %c0 = arith.constant 0 : index
    %c0_0 = arith.constant 0 : index
    %3 = vector.load %arg0[%c0, %c0_0] : memref<8x32xf32, #tpu.memory_space<vmem>>, vector<8x32xf32>
    %cst = arith.constant dense<0.000000e+00> : vector<8x8xf32>
    %4 = tpu.matmul %3, %3, %cst {dimension_numbers = #tpu.dot_dimension_numbers<[1], [1], [0], [0], [0, 0, 1, 0], [], []>} : vector<8x32xf32>, vector<8x32xf32>, vector<8x8xf32> -> vector<8x8xf32>
    %5 = tpu.iota {dimensions = array<i32: 0>} : vector<8x8xi32>
    %6 = tpu.iota {dimensions = array<i32: 1>} : vector<8x8xi32>
    %7 = arith.cmpi eq, %5, %6 : vector<8x8xi32>
    %cst_1 = arith.constant 0.000000e+00 : f32
    %8 = vector.broadcast %cst_1 : f32 to vector<8x8xf32>
    %9 = arith.select %7, %4, %8 : vector<8x8xi1>, vector<8x8xf32>
    %cst_2 = arith.constant dense<0.000000e+00> : vector<8xf32>
    %10 = vector.multi_reduction <add>, %9, %cst_2 [1] : vector<8x8xf32> to vector<8xf32>
    %11 = vector.shape_cast %10 : vector<8xf32> to vector<8x1xf32>
    %cst_3 = arith.constant dense<0.000000e+00> : vector<8xf32>
    %12 = vector.multi_reduction <add>, %9, %cst_3 [0] : vector<8x8xf32> to vector<8xf32>
    %13 = vector.shape_cast %12 : vector<8xf32> to vector<1x8xf32>
    %14 = vector.broadcast %11 : vector<8x1xf32> to vector<8x8xf32>
    %15 = vector.broadcast %13 : vector<1x8xf32> to vector<8x8xf32>
    %16 = arith.addf %14, %15 : vector<8x8xf32>
    %cst_4 = arith.constant 2.000000e+00 : f32
    %17 = vector.broadcast %cst_4 : f32 to vector<8x8xf32>
    %18 = arith.mulf %17, %4 : vector<8x8xf32>
    %19 = arith.subf %16, %18 : vector<8x8xf32>
    %cst_5 = arith.constant 0.000000e+00 : f32
    %20 = vector.broadcast %cst_5 : f32 to vector<8x8xf32>
    %21 = arith.select %2, %19, %20 : vector<8x8xi1>, vector<8x8xf32>
    %c0_6 = arith.constant 0 : index
    %c0_7 = arith.constant 0 : index
    %22 = vector.load %arg2[%c0_6, %c0_7] : memref<8x8xf32, #tpu.memory_space<vmem>>, vector<8x8xf32>
    tpu.vector_store %arg2[%c0_6, %c0_7], %21 {strides = array<i32>} : memref<8x8xf32, #tpu.memory_space<vmem>>, vector<8x8xf32>,
    %c0_8 = arith.constant 0 : index
    %c0_9 = arith.constant 0 : index
    %23 = vector.load %arg1[%c0_8, %c0_9] : memref<8x16xf32, #tpu.memory_space<vmem>>, vector<8x16xf32>
    %cst_10 = arith.constant dense<0.000000e+00> : vector<8x8xf32>
    %24 = tpu.matmul %23, %23, %cst_10 {dimension_numbers = #tpu.dot_dimension_numbers<[1], [1], [0], [0], [0, 0, 1, 0], [], []>} : vector<8x16xf32>, vector<8x16xf32>, vector<8x8xf32> -> vector<8x8xf32>
    %25 = tpu.iota {dimensions = array<i32: 0>} : vector<8x8xi32>
    %26 = tpu.iota {dimensions = array<i32: 1>} : vector<8x8xi32>
    %27 = arith.cmpi eq, %25, %26 : vector<8x8xi32>
    %cst_11 = arith.constant 0.000000e+00 : f32
    %28 = vector.broadcast %cst_11 : f32 to vector<8x8xf32>
    %29 = arith.select %27, %24, %28 : vector<8x8xi1>, vector<8x8xf32>
    %cst_12 = arith.constant dense<0.000000e+00> : vector<8xf32>
    %30 = vector.multi_reduction <add>, %29, %cst_12 [1] : vector<8x8xf32> to vector<8xf32>
    %31 = vector.shape_cast %30 : vector<8xf32> to vector<8x1xf32>
    %cst_13 = arith.constant dense<0.000000e+00> : vector<8xf32>
    %32 = vector.multi_reduction <add>, %29, %cst_13 [0] : vector<8x8xf32> to vector<8xf32>
    %33 = vector.shape_cast %32 : vector<8xf32> to vector<1x8xf32>
    %34 = vector.broadcast %31 : vector<8x1xf32> to vector<8x8xf32>
    %35 = vector.broadcast %33 : vector<1x8xf32> to vector<8x8xf32>
    %36 = arith.addf %34, %35 : vector<8x8xf32>
    %cst_14 = arith.constant 2.000000e+00 : f32
    %37 = vector.broadcast %cst_14 : f32 to vector<8x8xf32>
    %38 = arith.mulf %37, %24 : vector<8x8xf32>
    %39 = arith.subf %36, %38 : vector<8x8xf32>
    %cst_15 = arith.constant 0.000000e+00 : f32
    %40 = vector.broadcast %cst_15 : f32 to vector<8x8xf32>
    %41 = arith.select %2, %39, %40 : vector<8x8xi1>, vector<8x8xf32>
    %c0_16 = arith.constant 0 : index
    %c0_17 = arith.constant 0 : index
    %42 = vector.load %arg3[%c0_16, %c0_17] : memref<8x8xf32, #tpu.memory_space<vmem>>, vector<8x8xf32>
    tpu.vector_store %arg3[%c0_16, %c0_17], %41 {strides = array<i32>} : memref<8x8xf32, #tpu.memory_space<vmem>>, vector<8x8xf32>,
    return
  }
}

module attributes {stable_mosaic.version = 11 : i64} {
  func.func @_hsic_stats_kernel(%arg0: memref<8x32xf32, #tpu.memory_space<vmem>>, %arg1: memref<8x16xf32, #tpu.memory_space<vmem>>, %arg2: memref<1x1xf32, #tpu.memory_space<vmem>>, %arg3: memref<1x1xf32, #tpu.memory_space<vmem>>, %arg4: memref<1x1xf32, #tpu.memory_space<vmem>>, %arg5: memref<1x1xf32, #tpu.memory_space<vmem>>, %arg6: memref<1x1xf32, #tpu.memory_space<vmem>>) attributes {dimension_semantics = [], scalar_prefetch = 0 : i64, scratch_operands = 0 : i64, tpu.core_type = #tpu.core_type<tc>} {
    %0 = tpu.iota {dimensions = array<i32: 0>} : vector<8x8xi32>
    %1 = tpu.iota {dimensions = array<i32: 1>} : vector<8x8xi32>
    %2 = arith.cmpi eq, %0, %1 : vector<8x8xi32>
    %c0 = arith.constant 0 : index
    %c0_0 = arith.constant 0 : index
    %3 = vector.load %arg0[%c0, %c0_0] : memref<8x32xf32, #tpu.memory_space<vmem>>, vector<8x32xf32>
    %cst = arith.constant dense<0.000000e+00> : vector<8x8xf32>
    %4 = tpu.matmul %3, %3, %cst {dimension_numbers = #tpu.dot_dimension_numbers<[1], [1], [0], [0], [0, 0, 1, 0], [], []>} : vector<8x32xf32>, vector<8x32xf32>, vector<8x8xf32> -> vector<8x8xf32>
    %5 = tpu.iota {dimensions = array<i32: 0>} : vector<8x8xi32>
    %6 = tpu.iota {dimensions = array<i32: 1>} : vector<8x8xi32>
    %7 = arith.cmpi eq, %5, %6 : vector<8x8xi32>
    %cst_1 = arith.constant 0.000000e+00 : f32
    %8 = vector.broadcast %cst_1 : f32 to vector<8x8xf32>
    %9 = arith.select %7, %4, %8 : vector<8x8xi1>, vector<8x8xf32>
    %cst_2 = arith.constant dense<0.000000e+00> : vector<8xf32>
    %10 = vector.multi_reduction <add>, %9, %cst_2 [1] : vector<8x8xf32> to vector<8xf32>
    %11 = vector.shape_cast %10 : vector<8xf32> to vector<8x1xf32>
    %cst_3 = arith.constant dense<0.000000e+00> : vector<8xf32>
    %12 = vector.multi_reduction <add>, %9, %cst_3 [0] : vector<8x8xf32> to vector<8xf32>
    %13 = vector.shape_cast %12 : vector<8xf32> to vector<1x8xf32>
    %14 = vector.broadcast %11 : vector<8x1xf32> to vector<8x8xf32>
    %15 = vector.broadcast %13 : vector<1x8xf32> to vector<8x8xf32>
    %16 = arith.addf %14, %15 : vector<8x8xf32>
    %cst_4 = arith.constant 2.000000e+00 : f32
    %17 = vector.broadcast %cst_4 : f32 to vector<8x8xf32>
    %18 = arith.mulf %17, %4 : vector<8x8xf32>
    %19 = arith.subf %16, %18 : vector<8x8xf32>
    %cst_5 = arith.constant 0.000000e+00 : f32
    %20 = vector.broadcast %cst_5 : f32 to vector<8x8xf32>
    %21 = arith.subf %20, %19 : vector<8x8xf32>
    %c0_6 = arith.constant 0 : index
    %c0_7 = arith.constant 0 : index
    %22 = vector.load %arg2[%c0_6, %c0_7] : memref<1x1xf32, #tpu.memory_space<vmem>>, vector<1x1xf32>
    %23 = vector.broadcast %22 : vector<1x1xf32> to vector<8x8xf32>
    %24 = arith.mulf %21, %23 : vector<8x8xf32>
    %25 = math.exp %24 : vector<8x8xf32>
    %c0_8 = arith.constant 0 : index
    %c0_9 = arith.constant 0 : index
    %26 = vector.load %arg1[%c0_8, %c0_9] : memref<8x16xf32, #tpu.memory_space<vmem>>, vector<8x16xf32>
    %cst_10 = arith.constant dense<0.000000e+00> : vector<8x8xf32>
    %27 = tpu.matmul %26, %26, %cst_10 {dimension_numbers = #tpu.dot_dimension_numbers<[1], [1], [0], [0], [0, 0, 1, 0], [], []>} : vector<8x16xf32>, vector<8x16xf32>, vector<8x8xf32> -> vector<8x8xf32>
    %28 = tpu.iota {dimensions = array<i32: 0>} : vector<8x8xi32>
    %29 = tpu.iota {dimensions = array<i32: 1>} : vector<8x8xi32>
    %30 = arith.cmpi eq, %28, %29 : vector<8x8xi32>
    %cst_11 = arith.constant 0.000000e+00 : f32
    %31 = vector.broadcast %cst_11 : f32 to vector<8x8xf32>
    %32 = arith.select %30, %27, %31 : vector<8x8xi1>, vector<8x8xf32>
    %cst_12 = arith.constant dense<0.000000e+00> : vector<8xf32>
    %33 = vector.multi_reduction <add>, %32, %cst_12 [1] : vector<8x8xf32> to vector<8xf32>
    %34 = vector.shape_cast %33 : vector<8xf32> to vector<8x1xf32>
    %cst_13 = arith.constant dense<0.000000e+00> : vector<8xf32>
    %35 = vector.multi_reduction <add>, %32, %cst_13 [0] : vector<8x8xf32> to vector<8xf32>
    %36 = vector.shape_cast %35 : vector<8xf32> to vector<1x8xf32>
    %37 = vector.broadcast %34 : vector<8x1xf32> to vector<8x8xf32>
    %38 = vector.broadcast %36 : vector<1x8xf32> to vector<8x8xf32>
    %39 = arith.addf %37, %38 : vector<8x8xf32>
    %cst_14 = arith.constant 2.000000e+00 : f32
    %40 = vector.broadcast %cst_14 : f32 to vector<8x8xf32>
    %41 = arith.mulf %40, %27 : vector<8x8xf32>
    %42 = arith.subf %39, %41 : vector<8x8xf32>
    %cst_15 = arith.constant 0.000000e+00 : f32
    %43 = vector.broadcast %cst_15 : f32 to vector<8x8xf32>
    %44 = arith.subf %43, %42 : vector<8x8xf32>
    %c0_16 = arith.constant 0 : index
    %c0_17 = arith.constant 0 : index
    %45 = vector.load %arg3[%c0_16, %c0_17] : memref<1x1xf32, #tpu.memory_space<vmem>>, vector<1x1xf32>
    %46 = vector.broadcast %45 : vector<1x1xf32> to vector<8x8xf32>
    %47 = arith.mulf %44, %46 : vector<8x8xf32>
    %48 = math.exp %47 : vector<8x8xf32>
    %cst_18 = arith.constant dense<0.000000e+00> : vector<8xf32>
    %49 = vector.multi_reduction <add>, %25, %cst_18 [1] : vector<8x8xf32> to vector<8xf32>
    %50 = vector.shape_cast %49 : vector<8xf32> to vector<8x1xf32>
    %cst_19 = arith.constant 8.000000e+00 : f32
    %51 = vector.broadcast %cst_19 : f32 to vector<8x1xf32>
    %52 = arith.divf %50, %51 : vector<8x1xf32>
    %cst_20 = arith.constant dense<0.000000e+00> : vector<8xf32>
    %53 = vector.multi_reduction <add>, %25, %cst_20 [0] : vector<8x8xf32> to vector<8xf32>
    %54 = vector.shape_cast %53 : vector<8xf32> to vector<1x8xf32>
    %cst_21 = arith.constant 8.000000e+00 : f32
    %55 = vector.broadcast %cst_21 : f32 to vector<1x8xf32>
    %56 = arith.divf %54, %55 : vector<1x8xf32>
    %cst_22 = arith.constant dense<0.000000e+00> : vector<1xf32>
    %57 = vector.multi_reduction <add>, %56, %cst_22 [1] : vector<1x8xf32> to vector<1xf32>
    %58 = vector.shape_cast %57 : vector<1xf32> to vector<1x1xf32>
    %cst_23 = arith.constant 8.000000e+00 : f32
    %59 = vector.broadcast %cst_23 : f32 to vector<1x1xf32>
    %60 = arith.divf %58, %59 : vector<1x1xf32>
    %61 = vector.broadcast %52 : vector<8x1xf32> to vector<8x8xf32>
    %62 = arith.subf %25, %61 : vector<8x8xf32>
    %63 = vector.broadcast %56 : vector<1x8xf32> to vector<8x8xf32>
    %64 = arith.subf %62, %63 : vector<8x8xf32>
    %65 = vector.broadcast %60 : vector<1x1xf32> to vector<8x8xf32>
    %66 = arith.addf %64, %65 : vector<8x8xf32>
    %cst_24 = arith.constant dense<0.000000e+00> : vector<8xf32>
    %67 = vector.multi_reduction <add>, %48, %cst_24 [1] : vector<8x8xf32> to vector<8xf32>
    %68 = vector.shape_cast %67 : vector<8xf32> to vector<8x1xf32>
    %cst_25 = arith.constant 8.000000e+00 : f32
    %69 = vector.broadcast %cst_25 : f32 to vector<8x1xf32>
    %70 = arith.divf %68, %69 : vector<8x1xf32>
    %cst_26 = arith.constant dense<0.000000e+00> : vector<8xf32>
    %71 = vector.multi_reduction <add>, %48, %cst_26 [0] : vector<8x8xf32> to vector<8xf32>
    %72 = vector.shape_cast %71 : vector<8xf32> to vector<1x8xf32>
    %cst_27 = arith.constant 8.000000e+00 : f32
    %73 = vector.broadcast %cst_27 : f32 to vector<1x8xf32>
    %74 = arith.divf %72, %73 : vector<1x8xf32>
    %cst_28 = arith.constant dense<0.000000e+00> : vector<1xf32>
    %75 = vector.multi_reduction <add>, %74, %cst_28 [1] : vector<1x8xf32> to vector<1xf32>
    %76 = vector.shape_cast %75 : vector<1xf32> to vector<1x1xf32>
    %cst_29 = arith.constant 8.000000e+00 : f32
    %77 = vector.broadcast %cst_29 : f32 to vector<1x1xf32>
    %78 = arith.divf %76, %77 : vector<1x1xf32>
    %79 = vector.broadcast %70 : vector<8x1xf32> to vector<8x8xf32>
    %80 = arith.subf %48, %79 : vector<8x8xf32>
    %81 = vector.broadcast %74 : vector<1x8xf32> to vector<8x8xf32>
    %82 = arith.subf %80, %81 : vector<8x8xf32>
    %83 = vector.broadcast %78 : vector<1x1xf32> to vector<8x8xf32>
    %84 = arith.addf %82, %83 : vector<8x8xf32>
    %85 = arith.mulf %66, %84 : vector<8x8xf32>
    %cst_30 = arith.constant dense<0.000000e+00> : vector<8xf32>
    %86 = vector.multi_reduction <add>, %85, %cst_30 [1] : vector<8x8xf32> to vector<8xf32>
    %87 = vector.shape_cast %86 : vector<8xf32> to vector<8x1xf32>
    %cst_31 = arith.constant dense<0.000000e+00> : vector<1xf32>
    %88 = vector.multi_reduction <add>, %87, %cst_31 [0] : vector<8x1xf32> to vector<1xf32>
    %89 = vector.shape_cast %88 : vector<1xf32> to vector<1x1xf32>
    %cst_32 = arith.constant 8.000000e+00 : f32
    %90 = vector.broadcast %cst_32 : f32 to vector<1x1xf32>
    %91 = arith.divf %89, %90 : vector<1x1xf32>
    %92 = arith.mulf %66, %84 : vector<8x8xf32>
    %cst_33 = arith.constant 6.000000e+00 : f32
    %93 = vector.broadcast %cst_33 : f32 to vector<8x8xf32>
    %94 = arith.divf %92, %93 : vector<8x8xf32>
    %95 = arith.mulf %94, %94 : vector<8x8xf32>
    %cst_34 = arith.constant dense<0.000000e+00> : vector<8xf32>
    %96 = vector.multi_reduction <add>, %95, %cst_34 [1] : vector<8x8xf32> to vector<8xf32>
    %97 = vector.shape_cast %96 : vector<8xf32> to vector<8x1xf32>
    %cst_35 = arith.constant dense<0.000000e+00> : vector<1xf32>
    %98 = vector.multi_reduction <add>, %97, %cst_35 [0] : vector<8x1xf32> to vector<1xf32>
    %99 = vector.shape_cast %98 : vector<1xf32> to vector<1x1xf32>
    %cst_36 = arith.constant 0.000000e+00 : f32
    %100 = vector.broadcast %cst_36 : f32 to vector<8x8xf32>
    %101 = arith.select %2, %95, %100 : vector<8x8xi1>, vector<8x8xf32>
    %cst_37 = arith.constant dense<0.000000e+00> : vector<8xf32>
    %102 = vector.multi_reduction <add>, %101, %cst_37 [1] : vector<8x8xf32> to vector<8xf32>
    %103 = vector.shape_cast %102 : vector<8xf32> to vector<8x1xf32>
    %cst_38 = arith.constant dense<0.000000e+00> : vector<1xf32>
    %104 = vector.multi_reduction <add>, %103, %cst_38 [0] : vector<8x1xf32> to vector<1xf32>
    %105 = vector.shape_cast %104 : vector<1xf32> to vector<1x1xf32>
    %106 = arith.subf %99, %105 : vector<1x1xf32>
    %cst_39 = arith.constant 8.000000e+00 : f32
    %107 = vector.broadcast %cst_39 : f32 to vector<1x1xf32>
    %108 = arith.divf %106, %107 : vector<1x1xf32>
    %cst_40 = arith.constant 7.000000e+00 : f32
    %109 = vector.broadcast %cst_40 : f32 to vector<1x1xf32>
    %110 = arith.divf %108, %109 : vector<1x1xf32>
    %cst_41 = arith.constant 7.200000e+01 : f32
    %111 = vector.broadcast %cst_41 : f32 to vector<1x1xf32>
    %112 = arith.mulf %110, %111 : vector<1x1xf32>
    %cst_42 = arith.constant 4.000000e+00 : f32
    %113 = vector.broadcast %cst_42 : f32 to vector<1x1xf32>
    %114 = arith.mulf %112, %113 : vector<1x1xf32>
    %cst_43 = arith.constant 3.000000e+00 : f32
    %115 = vector.broadcast %cst_43 : f32 to vector<1x1xf32>
    %116 = arith.mulf %114, %115 : vector<1x1xf32>
    %cst_44 = arith.constant 8.000000e+00 : f32
    %117 = vector.broadcast %cst_44 : f32 to vector<1x1xf32>
    %118 = arith.divf %116, %117 : vector<1x1xf32>
    %cst_45 = arith.constant 7.000000e+00 : f32
    %119 = vector.broadcast %cst_45 : f32 to vector<1x1xf32>
    %120 = arith.divf %118, %119 : vector<1x1xf32>
    %cst_46 = arith.constant 6.000000e+00 : f32
    %121 = vector.broadcast %cst_46 : f32 to vector<1x1xf32>
    %122 = arith.divf %120, %121 : vector<1x1xf32>
    %cst_47 = arith.constant 5.000000e+00 : f32
    %123 = vector.broadcast %cst_47 : f32 to vector<1x1xf32>
    %124 = arith.divf %122, %123 : vector<1x1xf32>
    %cst_48 = arith.constant 0.000000e+00 : f32
    %125 = vector.broadcast %cst_48 : f32 to vector<8x8xf32>
    %126 = arith.select %2, %125, %25 : vector<8x8xi1>, vector<8x8xf32>
    %cst_49 = arith.constant dense<0.000000e+00> : vector<8xf32>
    %127 = vector.multi_reduction <add>, %126, %cst_49 [1] : vector<8x8xf32> to vector<8xf32>
    %128 = vector.shape_cast %127 : vector<8xf32> to vector<8x1xf32>
    %cst_50 = arith.constant dense<0.000000e+00> : vector<1xf32>
    %129 = vector.multi_reduction <add>, %128, %cst_50 [0] : vector<8x1xf32> to vector<1xf32>
    %130 = vector.shape_cast %129 : vector<1xf32> to vector<1x1xf32>
    %cst_51 = arith.constant 8.000000e+00 : f32
    %131 = vector.broadcast %cst_51 : f32 to vector<1x1xf32>
    %132 = arith.divf %130, %131 : vector<1x1xf32>
    %cst_52 = arith.constant 7.000000e+00 : f32
    %133 = vector.broadcast %cst_52 : f32 to vector<1x1xf32>
    %134 = arith.divf %132, %133 : vector<1x1xf32>
    %cst_53 = arith.constant 0.000000e+00 : f32
    %135 = vector.broadcast %cst_53 : f32 to vector<8x8xf32>
    %136 = arith.select %2, %135, %48 : vector<8x8xi1>, vector<8x8xf32>
    %cst_54 = arith.constant dense<0.000000e+00> : vector<8xf32>
    %137 = vector.multi_reduction <add>, %136, %cst_54 [1] : vector<8x8xf32> to vector<8xf32>
    %138 = vector.shape_cast %137 : vector<8xf32> to vector<8x1xf32>
    %cst_55 = arith.constant dense<0.000000e+00> : vector<1xf32>
    %139 = vector.multi_reduction <add>, %138, %cst_55 [0] : vector<8x1xf32> to vector<1xf32>
    %140 = vector.shape_cast %139 : vector<1xf32> to vector<1x1xf32>
    %cst_56 = arith.constant 8.000000e+00 : f32
    %141 = vector.broadcast %cst_56 : f32 to vector<1x1xf32>
    %142 = arith.divf %140, %141 : vector<1x1xf32>
    %cst_57 = arith.constant 7.000000e+00 : f32
    %143 = vector.broadcast %cst_57 : f32 to vector<1x1xf32>
    %144 = arith.divf %142, %143 : vector<1x1xf32>
    %145 = arith.mulf %134, %144 : vector<1x1xf32>
    %cst_58 = arith.constant 1.000000e+00 : f32
    %146 = vector.broadcast %cst_58 : f32 to vector<1x1xf32>
    %147 = arith.addf %146, %145 : vector<1x1xf32>
    %148 = arith.subf %147, %134 : vector<1x1xf32>
    %149 = arith.subf %148, %144 : vector<1x1xf32>
    %cst_59 = arith.constant 8.000000e+00 : f32
    %150 = vector.broadcast %cst_59 : f32 to vector<1x1xf32>
    %151 = arith.divf %149, %150 : vector<1x1xf32>
    %c0_60 = arith.constant 0 : index
    %c0_61 = arith.constant 0 : index
    %152 = vector.load %arg4[%c0_60, %c0_61] : memref<1x1xf32, #tpu.memory_space<vmem>>, vector<1x1xf32>
    tpu.vector_store %arg4[%c0_60, %c0_61], %91 {strides = array<i32>} : memref<1x1xf32, #tpu.memory_space<vmem>>, vector<1x1xf32>,
    %c0_62 = arith.constant 0 : index
    %c0_63 = arith.constant 0 : index
    %153 = vector.load %arg5[%c0_62, %c0_63] : memref<1x1xf32, #tpu.memory_space<vmem>>, vector<1x1xf32>
    tpu.vector_store %arg5[%c0_62, %c0_63], %124 {strides = array<i32>} : memref<1x1xf32, #tpu.memory_space<vmem>>, vector<1x1xf32>,
    %c0_64 = arith.constant 0 : index
    %c0_65 = arith.constant 0 : index
    %154 = vector.load %arg6[%c0_64, %c0_65] : memref<1x1xf32, #tpu.memory_space<vmem>>, vector<1x1xf32>
    tpu.vector_store %arg6[%c0_64, %c0_65], %151 {strides = array<i32>} : memref<1x1xf32, #tpu.memory_space<vmem>>, vector<1x1xf32>,
    return
  }
}

</mosaic_0001>

<llo_original>
// kernel: hsic_forward.2
$region0: #{hsic_forward.2}
  #allocation0 [shape = 'u32[]', space=smem, size = 0x4, offset = 0x4, fixed_abs, tag = 'smem constant byte address 0x4 - core index']
  #allocation1 [shape = 'u32[144,128]{1,0:T(1,128)}', space=vmem, size = 0x12000, scoped, tag = 'internal scratch']
  %s0 = inlined_call_operand.hbm [shape: f32[8,32], index: 0, kind: input, shape index: {}]
  %s1 = inlined_call_operand.hbm [shape: f32[8,16], index: 1, kind: input, shape index: {}]
  %s2 = inlined_call_operand.vmem [shape: f32[8,8], index: 2, kind: output, shape index: {0}]
  %s3 = inlined_call_operand.vmem [shape: f32[8,8], index: 3, kind: output, shape index: {1}]
  %4 = xla_tuple %s2, %s3
  %s5 = sld [smem:[#allocation0]]
  $region34: #{hsic_forward.2} parent=0
    _
  %s7 = ssub.s32 1, %s5
  %s8 = scalar_select 0, %s7, %s5
  $region1: #{hsic_forward.2} parent=0
    #allocation2 [shape = 'u8[4096]{0}', space=vmem, size = 0x1000, scoped, tag = 'input window, operand 0, single buffered']
    #allocation3 [shape = 's32[1]{0}', space=sflag, size = 0x4, scoped, tag = 'scoped memory for hsic_forward.2']
    #allocation4 [shape = 'u8[4096]{0}', space=vmem, size = 0x1000, scoped, tag = 'input window, operand 1, single buffered']
    #allocation5 [shape = 's32[1]{0}', space=sflag, size = 0x4, scoped, tag = 'scoped memory for hsic_forward.2']
    %9 = vsyncpa [#allocation3], 0
    %10 = vsyncpa [#allocation5], 0
    // Predicated region
    $region2: #{hsic_forward.2} parent=1 // pred_check
      _
    $region3: #{hsic_forward.2} parent=1 // pred_check_branch
      %12 = sbr.rel (0) target = $region5
    $region4: #{hsic_forward.2} parent=1 // pred_region
      %s14 = ssub.s32 128, 128
      %15 = vsyncadd [#allocation3], %s14
      %s17 = sshll.u32 [#allocation2], 4
      %s18 = int_to_ptr.vmem [resolvable:$true] %s17
      %20 = dma.hbm_to_vmem [thread:$0]  %s0, 128, %s18, [#allocation3]
    $region5: #{hsic_forward.2} parent=1 // pred_fallthru
      _
    // Predicated region
    $region6: #{hsic_forward.2} parent=1 // pred_check
      _
    $region7: #{hsic_forward.2} parent=1 // pred_check_branch
      %22 = sbr.rel (0) target = $region9
    $region8: #{hsic_forward.2} parent=1 // pred_region
      %s24 = ssub.s32 128, 128
      %25 = vsyncadd [#allocation5], %s24
      %s27 = sshll.u32 [#allocation4], 4
      %s28 = int_to_ptr.vmem [resolvable:$true] %s27
      %30 = dma.hbm_to_vmem [thread:$0]  %s1, 128, %s28, [#allocation5]
    $region9: #{hsic_forward.2} parent=1 // pred_fallthru
      _
    // Predicated region
    $region10: #{hsic_forward.2} parent=1 // pred_check
      _
    $region11: #{hsic_forward.2} parent=1 // pred_check_branch
      %32 = sbr.rel (0) target = $region13
    $region12: #{hsic_forward.2} parent=1 // pred_region
      %33 = dma.done [#allocation3], 128
    $region13: #{hsic_forward.2} parent=1 // pred_fallthru
      _
    // Predicated region
    $region14: #{hsic_forward.2} parent=1 // pred_check
      _
    $region15: #{hsic_forward.2} parent=1 // pred_check_branch
      %35 = sbr.rel (0) target = $region17
    $region16: #{hsic_forward.2} parent=1 // pred_region
      %36 = dma.done [#allocation5], 128
    $region17: #{hsic_forward.2} parent=1 // pred_fallthru
      _
    %v37 = vlaneseq
    %v38 = vshrl.u32 %v37, 7
    %v39 = vlaneseq
    %v40 = vand.u32 %v39, 127
    %vm41 = vcmp.lt.s32.totalorder %v38, %v40
    %v42 = vld [vmem:[#allocation2] sm:$0xff]
    %vm43 = vcmask 261120
    %v45 = vsel %vm43, %v42, 0
    %47 = vmatprep.subr.mxu0 0.0
    %48 = vmatpush1.xpose.msra.mxu0 %v45
    %49 = vmatprep.subr.mxu0 0.0
    %50 = vmatpush1.xpose.msra.mxu0 0.0
    %51 = vmatprep.subr.mxu0 0.0
    %52 = vmatpush1.xpose.msra.mxu0 0.0
    %53 = vmatprep.subr.mxu0 0.0
    %54 = vmatpush1.xpose.msra.mxu0 0.0
    %55 = vmatprep.subr.mxu0 0.0
    %56 = vmatpush1.xpose.msra.mxu0 0.0
    %57 = vmatprep.subr.mxu0 0.0
    %58 = vmatpush1.xpose.msra.mxu0 0.0
    %59 = vmatprep.subr.mxu0 0.0
    %60 = vmatpush1.xpose.msra.mxu0 0.0
    %61 = vmatprep.subr.mxu0 0.0
    %62 = vmatpush1.xpose.msra.mxu0 0.0
    %63 = vmatprep.subr.mxu0 0.0
    %64 = vmatpush1.xpose.msra.mxu0 0.0
    %65 = vmatprep.subr.mxu0 0.0
    %66 = vmatpush1.xpose.msra.mxu0 0.0
    %67 = vmatprep.subr.mxu0 0.0
    %68 = vmatpush1.xpose.msra.mxu0 0.0
    %69 = vmatprep.subr.mxu0 0.0
    %70 = vmatpush1.xpose.msra.mxu0 0.0
    %71 = vmatprep.subr.mxu0 0.0
    %72 = vmatpush1.xpose.msra.mxu0 0.0
    %73 = vmatprep.subr.mxu0 0.0
    %74 = vmatpush1.xpose.msra.mxu0 0.0
    %75 = vmatprep.subr.mxu0 0.0
    %76 = vmatpush1.xpose.msra.mxu0 0.0
    %77 = vmatprep.subr.mxu0 0.0
    %78 = vmatpush1.xpose.msra.mxu0 0.0
    %79 = vmatprep.subr.mxu0 0.0
    %80 = vmatpush1.xpose.msra.mxu0 0.0
    %81 = vmatprep.subr.mxu0 0.0
    %82 = vmatpush1.xpose.msra.mxu0 0.0
    %83 = vmatprep.subr.mxu0 0.0
    %84 = vmatpush1.xpose.msra.mxu0 0.0
    %85 = vmatprep.subr.mxu0 0.0
    %86 = vmatpush1.xpose.msra.mxu0 0.0
    %87 = vmatprep.subr.mxu0 0.0
    %88 = vmatpush1.xpose.msra.mxu0 0.0
    %89 = vmatprep.subr.mxu0 0.0
    %90 = vmatpush1.xpose.msra.mxu0 0.0
    %91 = vmatprep.subr.mxu0 0.0
    %92 = vmatpush1.xpose.msra.mxu0 0.0
    %93 = vmatprep.subr.mxu0 0.0
    %94 = vmatpush1.xpose.msra.mxu0 0.0
    %95 = vmatprep.subr.mxu0 0.0
    %96 = vmatpush1.xpose.msra.mxu0 0.0
    %97 = vmatprep.subr.mxu0 0.0
    %98 = vmatpush1.xpose.msra.mxu0 0.0
    %99 = vmatprep.subr.mxu0 0.0
    %100 = vmatpush1.xpose.msra.mxu0 0.0
    %101 = vmatprep.subr.mxu0 0.0
    %102 = vmatpush1.xpose.msra.mxu0 0.0
    %103 = vmatprep.subr.mxu0 0.0
    %104 = vmatpush1.xpose.msra.mxu0 0.0
    %105 = vmatprep.subr.mxu0 0.0
    %106 = vmatpush1.xpose.msra.mxu0 0.0
    %107 = vmatprep.subr.mxu0 0.0
    %108 = vmatpush1.xpose.msra.mxu0 0.0
    %109 = vmatprep.subr.mxu0 0.0
    %110 = vmatpush1.xpose.msra.mxu0 0.0
    %111 = vmatprep.mubr.f32.mxu0 0.0
    %112 = vmatmul.mubr.f32.gmra.mrb[0].mxu0 %v45
    %v113 = vpop.f32.mrb[0].mxu0
    %v114 = vadd.f32 0.0, %v113
    %v115 = vpop.f32.mrb[0].mxu0
    %116 = vdwg.mxu0
    %vm117 = vcmp.eq.s32.totalorder %v38, %v40
    %v118 = vsel %vm117, %v114, 0.0
    %vm119 = vcmask 64512
    %v120 = vsel %vm119, %v118, 0.0
    %121 = vadd.xlane.f32.xlu0 %v120
    %v122 = vpop.xlane.xlu0 %121
    %v123 = vrot.slane %v120, 4
    %v124 = vadd.f32 %v120, %v123
    %v125 = vrot.slane %v124, 2
    %v126 = vadd.f32 %v124, %v125
    %v127 = vrot.slane %v126, 1
    %v128 = vadd.f32 %v126, %v127
    %v129 = vadd.f32 %v122, %v128
    %v130 = vmul.f32 %v114, 2.0
    %v131 = vsub.f32 %v129, %v130
    %v132 = vsel %vm41, %v131, 0.0
    %133 = vst.msk [vmem:[%s2] sm:$0xff] %vm119, %v132
    %v134 = vld [vmem:[#allocation4] sm:$0xff]
    %vm135 = vcmask 130048
    %v137 = vsel %vm135, %v134, 0
    %139 = vmatprep.subr.mxu0 0.0
    %140 = vmatpush1.xpose.msra.mxu0 %v137
    %141 = vmatprep.subr.mxu0 0.0
    %142 = vmatpush1.xpose.msra.mxu0 0.0
    %143 = vmatprep.subr.mxu0 0.0
    %144 = vmatpush1.xpose.msra.mxu0 0.0
    %145 = vmatprep.subr.mxu0 0.0
    %146 = vmatpush1.xpose.msra.mxu0 0.0
    %147 = vmatprep.subr.mxu0 0.0
    %148 = vmatpush1.xpose.msra.mxu0 0.0
    %149 = vmatprep.subr.mxu0 0.0
    %150 = vmatpush1.xpose.msra.mxu0 0.0
    %151 = vmatprep.subr.mxu0 0.0
    %152 = vmatpush1.xpose.msra.mxu0 0.0
    %153 = vmatprep.subr.mxu0 0.0
    %154 = vmatpush1.xpose.msra.mxu0 0.0
    %155 = vmatprep.subr.mxu0 0.0
    %156 = vmatpush1.xpose.msra.mxu0 0.0
    %157 = vmatprep.subr.mxu0 0.0
    %158 = vmatpush1.xpose.msra.mxu0 0.0
    %159 = vmatprep.subr.mxu0 0.0
    %160 = vmatpush1.xpose.msra.mxu0 0.0
    %161 = vmatprep.subr.mxu0 0.0
    %162 = vmatpush1.xpose.msra.mxu0 0.0
    %163 = vmatprep.subr.mxu0 0.0
    %164 = vmatpush1.xpose.msra.mxu0 0.0
    %165 = vmatprep.subr.mxu0 0.0
    %166 = vmatpush1.xpose.msra.mxu0 0.0
    %167 = vmatprep.subr.mxu0 0.0
    %168 = vmatpush1.xpose.msra.mxu0 0.0
    %169 = vmatprep.subr.mxu0 0.0
    %170 = vmatpush1.xpose.msra.mxu0 0.0
    %171 = vmatprep.subr.mxu0 0.0
    %172 = vmatpush1.xpose.msra.mxu0 0.0
    %173 = vmatprep.subr.mxu0 0.0
    %174 = vmatpush1.xpose.msra.mxu0 0.0
    %175 = vmatprep.subr.mxu0 0.0
    %176 = vmatpush1.xpose.msra.mxu0 0.0
    %177 = vmatprep.subr.mxu0 0.0
    %178 = vmatpush1.xpose.msra.mxu0 0.0
    %179 = vmatprep.subr.mxu0 0.0
    %180 = vmatpush1.xpose.msra.mxu0 0.0
    %181 = vmatprep.subr.mxu0 0.0
    %182 = vmatpush1.xpose.msra.mxu0 0.0
    %183 = vmatprep.subr.mxu0 0.0
    %184 = vmatpush1.xpose.msra.mxu0 0.0
    %185 = vmatprep.subr.mxu0 0.0
    %186 = vmatpush1.xpose.msra.mxu0 0.0
    %187 = vmatprep.subr.mxu0 0.0
    %188 = vmatpush1.xpose.msra.mxu0 0.0
    %189 = vmatprep.subr.mxu0 0.0
    %190 = vmatpush1.xpose.msra.mxu0 0.0
    %191 = vmatprep.subr.mxu0 0.0
    %192 = vmatpush1.xpose.msra.mxu0 0.0
    %193 = vmatprep.subr.mxu0 0.0
    %194 = vmatpush1.xpose.msra.mxu0 0.0
    %195 = vmatprep.subr.mxu0 0.0
    %196 = vmatpush1.xpose.msra.mxu0 0.0
    %197 = vmatprep.subr.mxu0 0.0
    %198 = vmatpush1.xpose.msra.mxu0 0.0
    %199 = vmatprep.subr.mxu0 0.0
    %200 = vmatpush1.xpose.msra.mxu0 0.0
    %201 = vmatprep.subr.mxu0 0.0
    %202 = vmatpush1.xpose.msra.mxu0 0.0
    %203 = vmatprep.mubr.f32.mxu0 0.0
    %204 = vmatmul.mubr.f32.gmra.mrb[0].mxu0 %v137
    %v205 = vpop.f32.mrb[0].mxu0
    %v206 = vadd.f32 0.0, %v205
    %v207 = vpop.f32.mrb[0].mxu0
    %208 = vdwg.mxu0
    %v209 = vsel %vm117, %v206, 0.0
    %v210 = vsel %vm119, %v209, 0.0
    %211 = vadd.xlane.f32.xlu0 %v210
    %v212 = vpop.xlane.xlu0 %211
    %v213 = vrot.slane %v210, 4
    %v214 = vadd.f32 %v210, %v213
    %v215 = vrot.slane %v214, 2
    %v216 = vadd.f32 %v214, %v215
    %v217 = vrot.slane %v216, 1
    %v218 = vadd.f32 %v216, %v217
    %v219 = vadd.f32 %v212, %v218
    %v220 = vmul.f32 %v206, 2.0
    %v221 = vsub.f32 %v219, %v220
    %v222 = vsel %vm41, %v221, 0.0
    %223 = vst.msk [vmem:[%s3] sm:$0xff] %vm119, %v222
    // Predicated region
    $region18: #{hsic_forward.2} parent=1 // pred_check
      _
    $region19: #{hsic_forward.2} parent=1 // pred_check_branch
      %225 = sbr.rel (0) target = $region21
    $region20: #{hsic_forward.2} parent=1 // pred_region
      _
    $region21: #{hsic_forward.2} parent=1 // pred_fallthru
      _
    // Predicated region
    $region22: #{hsic_forward.2} parent=1 // pred_check
      _
    $region23: #{hsic_forward.2} parent=1 // pred_check_branch
      %227 = sbr.rel (0) target = $region25
    $region24: #{hsic_forward.2} parent=1 // pred_region
      _
    $region25: #{hsic_forward.2} parent=1 // pred_fallthru
      _
    // Predicated region
    $region26: #{hsic_forward.2} parent=1 // pred_check
      _
    $region27: #{hsic_forward.2} parent=1 // pred_check_branch
      %229 = sbr.rel (0) target = $region29
    $region28: #{hsic_forward.2} parent=1 // pred_region
      _
    $region29: #{hsic_forward.2} parent=1 // pred_fallthru
      _
    // Predicated region
    $region30: #{hsic_forward.2} parent=1 // pred_check
      _
    $region31: #{hsic_forward.2} parent=1 // pred_check_branch
      %231 = sbr.rel (0) target = $region33
    $region32: #{hsic_forward.2} parent=1 // pred_region
      _
    $region33: #{hsic_forward.2} parent=1 // pred_fallthru
      _
    %232 = vsyncpa [#allocation3], 1
    %233 = vsyncpa [#allocation5], 1

// kernel: hsic_forward.3
$region0: #{hsic_forward.3}
  #allocation0 [shape = 'u32[]', space=smem, size = 0x4, offset = 0x4, fixed_abs, tag = 'smem constant byte address 0x4 - core index']
  #allocation1 [shape = 'u32[144,128]{1,0:T(1,128)}', space=vmem, size = 0x12000, scoped, tag = 'internal scratch']
  #allocation2 [shape = 'f32[1,1]{1,0:T(1,128)S(1)}', space=vmem, size = 0x200, scoped, tag = 'scoped memory for hsic_forward.3']
  #allocation3 [shape = 'f32[1,1]{1,0:T(1,128)S(1)}', space=vmem, size = 0x200, scoped, tag = 'scoped memory for hsic_forward.3']
  %s0 = inlined_call_operand.vmem [shape: f32[8,32], index: 0, kind: input, shape index: {}]
  %s1 = inlined_call_operand.vmem [shape: f32[8,16], index: 1, kind: input, shape index: {}]
  %s2 = inlined_call_operand.<no memory space> [shape: f32[1,1], index: 2, kind: input, shape index: {}]
  %s3 = inlined_call_operand.<no memory space> [shape: f32[1,1], index: 3, kind: input, shape index: {}]
  %s4 = inlined_call_operand.hbm [shape: f32[1,1], index: 4, kind: output, shape index: {0}]
  %s5 = inlined_call_operand.hbm [shape: f32[1,1], index: 5, kind: output, shape index: {1}]
  %s6 = inlined_call_operand.hbm [shape: f32[1,1], index: 6, kind: output, shape index: {2}]
  %7 = xla_tuple %s4, %s5, %s6
  %s8 = sld [smem:[#allocation0]]
  $region42: #{hsic_forward.3} parent=0
    _
  %s10 = ssub.s32 1, %s8
  %s11 = scalar_select 0, %s10, %s8
  %v12 = vstv %s2
  %13 = vst [vmem:[#allocation2] sm:$0x1] %v12
  %v14 = vstv %s3
  %15 = vst [vmem:[#allocation3] sm:$0x1] %v14
  $region1: #{hsic_forward.3} parent=0
    #allocation4 [shape = 'u8[512]{0}', space=vmem, size = 0x400, scoped, tag = 'output window, operand 0, single buffered']
    #allocation5 [shape = 's32[1]{0}', space=sflag, size = 0x4, scoped, tag = 'scoped memory for hsic_forward.3']
    #allocation6 [shape = 'u8[512]{0}', space=vmem, size = 0x400, scoped, tag = 'output window, operand 1, single buffered']
    #allocation7 [shape = 's32[1]{0}', space=sflag, size = 0x4, scoped, tag = 'scoped memory for hsic_forward.3']
    #allocation8 [shape = 'u8[512]{0}', space=vmem, size = 0x400, scoped, tag = 'output window, operand 2, single buffered']
    %16 = vsyncpa [#allocation5], 0
    %17 = vsyncpa [#allocation7], 0
    // Predicated region
    $region2: #{hsic_forward.3} parent=1 // pred_check
      _
    $region3: #{hsic_forward.3} parent=1 // pred_check_branch
      %19 = sbr.rel (0) target = $region5
    $region4: #{hsic_forward.3} parent=1 // pred_region
      _
    $region5: #{hsic_forward.3} parent=1 // pred_fallthru
      _
    // Predicated region
    $region6: #{hsic_forward.3} parent=1 // pred_check
      _
    $region7: #{hsic_forward.3} parent=1 // pred_check_branch
      %21 = sbr.rel (0) target = $region9
    $region8: #{hsic_forward.3} parent=1 // pred_region
      _
    $region9: #{hsic_forward.3} parent=1 // pred_fallthru
      _
    // Predicated region
    $region10: #{hsic_forward.3} parent=1 // pred_check
      _
    $region11: #{hsic_forward.3} parent=1 // pred_check_branch
      %23 = sbr.rel (0) target = $region13
    $region12: #{hsic_forward.3} parent=1 // pred_region
      _
    $region13: #{hsic_forward.3} parent=1 // pred_fallthru
      _
    // Predicated region
    $region14: #{hsic_forward.3} parent=1 // pred_check
      _
    $region15: #{hsic_forward.3} parent=1 // pred_check_branch
      %25 = sbr.rel (0) target = $region17
    $region16: #{hsic_forward.3} parent=1 // pred_region
      _
    $region17: #{hsic_forward.3} parent=1 // pred_fallthru
      _
    %v26 = vlaneseq
    %v27 = vshrl.u32 %v26, 7
    %v28 = vlaneseq
    %v29 = vand.u32 %v28, 127
    %vm30 = vcmp.eq.s32.totalorder %v27, %v29
    %v31 = vld [vmem:[%s0] sm:$0xff]
    %vm32 = vcmask 261120
    %v34 = vsel %vm32, %v31, 0
    %36 = vmatprep.subr.mxu0 0.0
    %37 = vmatpush1.xpose.msra.mxu0 %v34
    %38 = vmatprep.subr.mxu0 0.0
    %39 = vmatpush1.xpose.msra.mxu0 0.0
    %40 = vmatprep.subr.mxu0 0.0
    %41 = vmatpush1.xpose.msra.mxu0 0.0
    %42 = vmatprep.subr.mxu0 0.0
    %43 = vmatpush1.xpose.msra.mxu0 0.0
    %44 = vmatprep.subr.mxu0 0.0
    %45 = vmatpush1.xpose.msra.mxu0 0.0
    %46 = vmatprep.subr.mxu0 0.0
    %47 = vmatpush1.xpose.msra.mxu0 0.0
    %48 = vmatprep.subr.mxu0 0.0
    %49 = vmatpush1.xpose.msra.mxu0 0.0
    %50 = vmatprep.subr.mxu0 0.0
    %51 = vmatpush1.xpose.msra.mxu0 0.0
    %52 = vmatprep.subr.mxu0 0.0
    %53 = vmatpush1.xpose.msra.mxu0 0.0
    %54 = vmatprep.subr.mxu0 0.0
    %55 = vmatpush1.xpose.msra.mxu0 0.0
    %56 = vmatprep.subr.mxu0 0.0
    %57 = vmatpush1.xpose.msra.mxu0 0.0
    %58 = vmatprep.subr.mxu0 0.0
    %59 = vmatpush1.xpose.msra.mxu0 0.0
    %60 = vmatprep.subr.mxu0 0.0
    %61 = vmatpush1.xpose.msra.mxu0 0.0
    %62 = vmatprep.subr.mxu0 0.0
    %63 = vmatpush1.xpose.msra.mxu0 0.0
    %64 = vmatprep.subr.mxu0 0.0
    %65 = vmatpush1.xpose.msra.mxu0 0.0
    %66 = vmatprep.subr.mxu0 0.0
    %67 = vmatpush1.xpose.msra.mxu0 0.0
    %68 = vmatprep.subr.mxu0 0.0
    %69 = vmatpush1.xpose.msra.mxu0 0.0
    %70 = vmatprep.subr.mxu0 0.0
    %71 = vmatpush1.xpose.msra.mxu0 0.0
    %72 = vmatprep.subr.mxu0 0.0
    %73 = vmatpush1.xpose.msra.mxu0 0.0
    %74 = vmatprep.subr.mxu0 0.0
    %75 = vmatpush1.xpose.msra.mxu0 0.0
    %76 = vmatprep.subr.mxu0 0.0
    %77 = vmatpush1.xpose.msra.mxu0 0.0
    %78 = vmatprep.subr.mxu0 0.0
    %79 = vmatpush1.xpose.msra.mxu0 0.0
    %80 = vmatprep.subr.mxu0 0.0
    %81 = vmatpush1.xpose.msra.mxu0 0.0
    %82 = vmatprep.subr.mxu0 0.0
    %83 = vmatpush1.xpose.msra.mxu0 0.0
    %84 = vmatprep.subr.mxu0 0.0
    %85 = vmatpush1.xpose.msra.mxu0 0.0
    %86 = vmatprep.subr.mxu0 0.0
    %87 = vmatpush1.xpose.msra.mxu0 0.0
    %88 = vmatprep.subr.mxu0 0.0
    %89 = vmatpush1.xpose.msra.mxu0 0.0
    %90 = vmatprep.subr.mxu0 0.0
    %91 = vmatpush1.xpose.msra.mxu0 0.0
    %92 = vmatprep.subr.mxu0 0.0
    %93 = vmatpush1.xpose.msra.mxu0 0.0
    %94 = vmatprep.subr.mxu0 0.0
    %95 = vmatpush1.xpose.msra.mxu0 0.0
    %96 = vmatprep.subr.mxu0 0.0
    %97 = vmatpush1.xpose.msra.mxu0 0.0
    %98 = vmatprep.subr.mxu0 0.0
    %99 = vmatpush1.xpose.msra.mxu0 0.0
    %100 = vmatprep.mubr.f32.mxu0 0.0
    %101 = vmatmul.mubr.f32.gmra.mrb[0].mxu0 %v34
    %v102 = vpop.f32.mrb[0].mxu0
    %v103 = vadd.f32 0.0, %v102
    %v104 = vpop.f32.mrb[0].mxu0
    %105 = vdwg.mxu0
    %v106 = vsel %vm30, %v103, 0.0
    %vm107 = vcmask 64512
    %v108 = vsel %vm107, %v106, 0.0
    %109 = vadd.xlane.f32.xlu0 %v108
    %v110 = vpop.xlane.xlu0 %109
    %v111 = vrot.slane %v108, 4
    %v112 = vadd.f32 %v108, %v111
    %v113 = vrot.slane %v112, 2
    %v114 = vadd.f32 %v112, %v113
    %v115 = vrot.slane %v114, 1
    %v116 = vadd.f32 %v114, %v115
    %v117 = vadd.f32 %v110, %v116
    %v118 = vmul.f32 %v103, 2.0
    %v119 = vsub.f32 %v117, %v118
    %v120 = vsub.f32 0.0, %v119
    %v121 = vld [vmem:[#allocation2] sm:$0x1]
    %v123 = vlaneseq
    %v124 = vshrl.u32 %v123, 7
    %v125 = vsub.s32 0, %v124
    %v126 = vrot.slane %v121, %v125
    %127 = vset.pattern.permute.xlu0 0
    %128 = vperm.xlu0 %127, %v126
    %v129 = vpop.permute.xlu0 %128
    %v131 = vmul.f32 %v120, %v129
    %v132 = vmul.f32 %v131, 1.442695
    %v133 = vpow.pop %v132
    %v134 = vld [vmem:[%s1] sm:$0xff]
    %vm135 = vcmask 130048
    %v137 = vsel %vm135, %v134, 0
    %139 = vmatprep.subr.mxu0 0.0
    %140 = vmatpush1.xpose.msra.mxu0 %v137
    %141 = vmatprep.subr.mxu0 0.0
    %142 = vmatpush1.xpose.msra.mxu0 0.0
    %143 = vmatprep.subr.mxu0 0.0
    %144 = vmatpush1.xpose.msra.mxu0 0.0
    %145 = vmatprep.subr.mxu0 0.0
    %146 = vmatpush1.xpose.msra.mxu0 0.0
    %147 = vmatprep.subr.mxu0 0.0
    %148 = vmatpush1.xpose.msra.mxu0 0.0
    %149 = vmatprep.subr.mxu0 0.0
    %150 = vmatpush1.xpose.msra.mxu0 0.0
    %151 = vmatprep.subr.mxu0 0.0
    %152 = vmatpush1.xpose.msra.mxu0 0.0
    %153 = vmatprep.subr.mxu0 0.0
    %154 = vmatpush1.xpose.msra.mxu0 0.0
    %155 = vmatprep.subr.mxu0 0.0
    %156 = vmatpush1.xpose.msra.mxu0 0.0
    %157 = vmatprep.subr.mxu0 0.0
    %158 = vmatpush1.xpose.msra.mxu0 0.0
    %159 = vmatprep.subr.mxu0 0.0
    %160 = vmatpush1.xpose.msra.mxu0 0.0
    %161 = vmatprep.subr.mxu0 0.0
    %162 = vmatpush1.xpose.msra.mxu0 0.0
    %163 = vmatprep.subr.mxu0 0.0
    %164 = vmatpush1.xpose.msra.mxu0 0.0
    %165 = vmatprep.subr.mxu0 0.0
    %166 = vmatpush1.xpose.msra.mxu0 0.0
    %167 = vmatprep.subr.mxu0 0.0
    %168 = vmatpush1.xpose.msra.mxu0 0.0
    %169 = vmatprep.subr.mxu0 0.0
    %170 = vmatpush1.xpose.msra.mxu0 0.0
    %171 = vmatprep.subr.mxu0 0.0
    %172 = vmatpush1.xpose.msra.mxu0 0.0
    %173 = vmatprep.subr.mxu0 0.0
    %174 = vmatpush1.xpose.msra.mxu0 0.0
    %175 = vmatprep.subr.mxu0 0.0
    %176 = vmatpush1.xpose.msra.mxu0 0.0
    %177 = vmatprep.subr.mxu0 0.0
    %178 = vmatpush1.xpose.msra.mxu0 0.0
    %179 = vmatprep.subr.mxu0 0.0
    %180 = vmatpush1.xpose.msra.mxu0 0.0
    %181 = vmatprep.subr.mxu0 0.0
    %182 = vmatpush1.xpose.msra.mxu0 0.0
    %183 = vmatprep.subr.mxu0 0.0
    %184 = vmatpush1.xpose.msra.mxu0 0.0
    %185 = vmatprep.subr.mxu0 0.0
    %186 = vmatpush1.xpose.msra.mxu0 0.0
    %187 = vmatprep.subr.mxu0 0.0
    %188 = vmatpush1.xpose.msra.mxu0 0.0
    %189 = vmatprep.subr.mxu0 0.0
    %190 = vmatpush1.xpose.msra.mxu0 0.0
    %191 = vmatprep.subr.mxu0 0.0
    %192 = vmatpush1.xpose.msra.mxu0 0.0
    %193 = vmatprep.subr.mxu0 0.0
    %194 = vmatpush1.xpose.msra.mxu0 0.0
    %195 = vmatprep.subr.mxu0 0.0
    %196 = vmatpush1.xpose.msra.mxu0 0.0
    %197 = vmatprep.subr.mxu0 0.0
    %198 = vmatpush1.xpose.msra.mxu0 0.0
    %199 = vmatprep.subr.mxu0 0.0
    %200 = vmatpush1.xpose.msra.mxu0 0.0
    %201 = vmatprep.subr.mxu0 0.0
    %202 = vmatpush1.xpose.msra.mxu0 0.0
    %203 = vmatprep.mubr.f32.mxu0 0.0
    %204 = vmatmul.mubr.f32.gmra.mrb[0].mxu0 %v137
    %v205 = vpop.f32.mrb[0].mxu0
    %v206 = vadd.f32 0.0, %v205
    %v207 = vpop.f32.mrb[0].mxu0
    %208 = vdwg.mxu0
    %v209 = vsel %vm30, %v206, 0.0
    %v210 = vsel %vm107, %v209, 0.0
    %211 = vadd.xlane.f32.xlu0 %v210
    %v212 = vpop.xlane.xlu0 %211
    %v213 = vrot.slane %v210, 4
    %v214 = vadd.f32 %v210, %v213
    %v215 = vrot.slane %v214, 2
    %v216 = vadd.f32 %v214, %v215
    %v217 = vrot.slane %v216, 1
    %v218 = vadd.f32 %v216, %v217
    %v219 = vadd.f32 %v212, %v218
    %v220 = vmul.f32 %v206, 2.0
    %v221 = vsub.f32 %v219, %v220
    %v222 = vsub.f32 0.0, %v221
    %v223 = vld [vmem:[#allocation3] sm:$0x1]
    %v225 = vlaneseq
    %v226 = vshrl.u32 %v225, 7
    %v227 = vsub.s32 0, %v226
    %v228 = vrot.slane %v223, %v227
    %229 = vset.pattern.permute.xlu0 0
    %230 = vperm.xlu0 %229, %v228
    %v231 = vpop.permute.xlu0 %230
    %v233 = vmul.f32 %v222, %v231
    %v234 = vmul.f32 %v233, 1.442695
    %v235 = vpow.pop %v234
    %v236 = vsel %vm107, %v133, 0.0
    %237 = vadd.xlane.f32.xlu0 %v236
    %v238 = vpop.xlane.xlu0 %237
    %v239 = vrcp.pop 8.0
    %v240 = vmul.f32 %v238, %v239
    %v241 = vrot.slane %v236, 4
    %v242 = vadd.f32 %v236, %v241
    %v243 = vrot.slane %v242, 2
    %v244 = vadd.f32 %v242, %v243
    %v245 = vrot.slane %v244, 1
    %v246 = vadd.f32 %v244, %v245
    %v247 = vmul.f32 %v246, %v239
    %v248 = vsel %vm107, %v247, 0.0
    %249 = vadd.xlane.f32.xlu0 %v248
    %v250 = vpop.xlane.xlu0 %249
    %v251 = vmul.f32 %v250, %v239
    %v252 = vsub.f32 %v133, %v240
    %v253 = vsub.f32 %v252, %v247
    %v254 = vadd.f32 %v253, %v251
    %v255 = vsel %vm107, %v235, 0.0
    %256 = vadd.xlane.f32.xlu0 %v255
    %v257 = vpop.xlane.xlu0 %256
    %v258 = vmul.f32 %v257, %v239
    %v259 = vrot.slane %v255, 4
    %v260 = vadd.f32 %v255, %v259
    %v261 = vrot.slane %v260, 2
    %v262 = vadd.f32 %v260, %v261
    %v263 = vrot.slane %v262, 1
    %v264 = vadd.f32 %v262, %v263
    %v265 = vmul.f32 %v264, %v239
    %v266 = vsel %vm107, %v265, 0.0
    %267 = vadd.xlane.f32.xlu0 %v266
    %v268 = vpop.xlane.xlu0 %267
    %v269 = vmul.f32 %v268, %v239
    %v270 = vsub.f32 %v235, %v258
    %v271 = vsub.f32 %v270, %v265
    %v272 = vadd.f32 %v271, %v269
    %v273 = vmul.f32 %v254, %v272
    %v274 = vsel %vm107, %v273, 0.0
    %275 = vadd.xlane.f32.xlu0 %v274
    %v276 = vpop.xlane.xlu0 %275
    %v277 = vrot.slane %v276, 4
    %v278 = vadd.f32 %v276, %v277
    %v279 = vrot.slane %v278, 2
    %v280 = vadd.f32 %v278, %v279
    %v281 = vrot.slane %v280, 1
    %v282 = vadd.f32 %v280, %v281
    %v283 = vmul.f32 %v282, %v239
    %v284 = vrcp.pop 6.0
    %v285 = vmul.f32 %v273, %v284
    %v286 = vmul.f32 %v285, %v285
    %v287 = vsel %vm107, %v286, 0.0
    %288 = vadd.xlane.f32.xlu0 %v287
    %v289 = vpop.xlane.xlu0 %288
    %v290 = vrot.slane %v289, 4
    %v291 = vadd.f32 %v289, %v290
    %v292 = vrot.slane %v291, 2
    %v293 = vadd.f32 %v291, %v292
    %v294 = vrot.slane %v293, 1
    %v295 = vadd.f32 %v293, %v294
    %v296 = vsel %vm30, %v286, 0.0
    %v297 = vsel %vm107, %v296, 0.0
    %298 = vadd.xlane.f32.xlu0 %v297
    %v299 = vpop.xlane.xlu0 %298
    %v300 = vrot.slane %v299, 4
    %v301 = vadd.f32 %v299, %v300
    %v302 = vrot.slane %v301, 2
    %v303 = vadd.f32 %v301, %v302
    %v304 = vrot.slane %v303, 1
    %v305 = vadd.f32 %v303, %v304
    %v306 = vsub.f32 %v295, %v305
    %v307 = vmul.f32 %v306, %v239
    %v308 = vrcp.pop 7.0
    %v309 = vmul.f32 %v307, %v308
    %v310 = vmul.f32 %v309, 72.0
    %v311 = vmul.f32 %v310, 4.0
    %v312 = vmul.f32 %v311, 3.0
    %v313 = vmul.f32 %v312, %v239
    %v314 = vmul.f32 %v313, %v308
    %v315 = vmul.f32 %v314, %v284
    %v316 = vrcp.pop 5.0
    %v317 = vmul.f32 %v315, %v316
    %v318 = vsel %vm30, 0.0, %v133
    %v319 = vsel %vm107, %v318, 0.0
    %320 = vadd.xlane.f32.xlu0 %v319
    %v321 = vpop.xlane.xlu0 %320
    %v322 = vrot.slane %v321, 4
    %v323 = vadd.f32 %v321, %v322
    %v324 = vrot.slane %v323, 2
    %v325 = vadd.f32 %v323, %v324
    %v326 = vrot.slane %v325, 1
    %v327 = vadd.f32 %v325, %v326
    %v328 = vmul.f32 %v327, %v239
    %v329 = vmul.f32 %v328, %v308
    %v330 = vsel %vm30, 0.0, %v235
    %v331 = vsel %vm107, %v330, 0.0
    %332 = vadd.xlane.f32.xlu0 %v331
    %v333 = vpop.xlane.xlu0 %332
    %v334 = vrot.slane %v333, 4
    %v335 = vadd.f32 %v333, %v334
    %v336 = vrot.slane %v335, 2
    %v337 = vadd.f32 %v335, %v336
    %v338 = vrot.slane %v337, 1
    %v339 = vadd.f32 %v337, %v338
    %v340 = vmul.f32 %v339, %v239
    %v341 = vmul.f32 %v340, %v308
    %v342 = vmul.f32 %v329, %v341
    %v343 = vadd.f32 %v342, 1.0
    %v344 = vsub.f32 %v343, %v329
    %v345 = vsub.f32 %v344, %v341
    %v346 = vmul.f32 %v345, %v239
    %vm347 = vcmask 0
    %348 = vst.msk [vmem:[#allocation4] sm:$0x1] %vm347, %v283
    %349 = vst.msk [vmem:[#allocation6] sm:$0x1] %vm347, %v317
    %350 = vst.msk [vmem:[#allocation8] sm:$0x1] %vm347, %v346
    // Predicated region
    $region18: #{hsic_forward.3} parent=1 // pred_check
      _
    $region19: #{hsic_forward.3} parent=1 // pred_check_branch
      %352 = sbr.rel (0) target = $region21
    $region20: #{hsic_forward.3} parent=1 // pred_region
      %s354 = ssub.s32 16, 16
      %355 = vsyncadd [#allocation5], %s354
      %s357 = sshll.u32 [#allocation4], 4
      %s358 = int_to_ptr.vmem [resolvable:$true] %s357
      %360 = dma.vmem_to_hbm [thread:$0]  %s358, 16, %s4, [#allocation5]
    $region21: #{hsic_forward.3} parent=1 // pred_fallthru
      _
    // Predicated region
    $region22: #{hsic_forward.3} parent=1 // pred_check
      _
    $region23: #{hsic_forward.3} parent=1 // pred_check_branch
      %362 = sbr.rel (0) target = $region25
    $region24: #{hsic_forward.3} parent=1 // pred_region
      %s364 = ssub.s32 16, 16
      %365 = vsyncadd [#allocation7], %s364
      %s367 = sshll.u32 [#allocation6], 4
      %s368 = int_to_ptr.vmem [resolvable:$true] %s367
      %370 = dma.vmem_to_hbm [thread:$0]  %s368, 16, %s5, [#allocation7]
    $region25: #{hsic_forward.3} parent=1 // pred_fallthru
      _
    // Predicated region
    $region26: #{hsic_forward.3} parent=1 // pred_check
      _
    $region27: #{hsic_forward.3} parent=1 // pred_check_branch
      %372 = sbr.rel (0) target = $region29
    $region28: #{hsic_forward.3} parent=1 // pred_region
      %s374 = ssub.s32 16, 16
      %375 = vsyncadd [#allocation7], %s374
      %s377 = sshll.u32 [#allocation8], 4
      %s378 = int_to_ptr.vmem [resolvable:$true] %s377
      %380 = dma.vmem_to_hbm [thread:$0]  %s378, 16, %s6, [#allocation7]
    $region29: #{hsic_forward.3} parent=1 // pred_fallthru
      _
    // Predicated region
    $region30: #{hsic_forward.3} parent=1 // pred_check
      _
    $region31: #{hsic_forward.3} parent=1 // pred_check_branch
      %382 = sbr.rel (0) target = $region33
    $region32: #{hsic_forward.3} parent=1 // pred_region
      %383 = dma.done [#allocation5], 16
    $region33: #{hsic_forward.3} parent=1 // pred_fallthru
      _
    // Predicated region
    $region34: #{hsic_forward.3} parent=1 // pred_check
      _
    $region35: #{hsic_forward.3} parent=1 // pred_check_branch
      %385 = sbr.rel (0) target = $region37
    $region36: #{hsic_forward.3} parent=1 // pred_region
      %386 = dma.done [#allocation7], 16
    $region37: #{hsic_forward.3} parent=1 // pred_fallthru
      _
    // Predicated region
    $region38: #{hsic_forward.3} parent=1 // pred_check
      _
    $region39: #{hsic_forward.3} parent=1 // pred_check_branch
      %388 = sbr.rel (0) target = $region41
    $region40: #{hsic_forward.3} parent=1 // pred_region
      %389 = dma.done [#allocation7], 16
    $region41: #{hsic_forward.3} parent=1 // pred_fallthru
      _
    %390 = vsyncpa [#allocation5], 1
    %391 = vsyncpa [#allocation7], 1

</llo_original>
